<compile_context>
chip_gen: v5e
topology: v5e:2x2
jax: 0.10.0
libtpu: 0.0.40
codegen_flags: <defaults>
</compile_context>

<pallas_src>
import jax
import jax.numpy as jnp
from jax.experimental import pallas as pl
from jax.experimental.pallas import tpu as pltpu


def _read2x2(ref):
    """Read a (2,2) SMEM weight as a tuple-of-tuples of f32 scalars."""
    return (
        (ref[0, 0].astype(jnp.float32), ref[0, 1].astype(jnp.float32)),
        (ref[1, 0].astype(jnp.float32), ref[1, 1].astype(jnp.float32)),
    )


def _mat2(a, b):
    """2x2 scalar matmul a @ b on tuples-of-tuples (scalar ALU only)."""
    return (
        (a[0][0] * b[0][0] + a[0][1] * b[1][0],
         a[0][0] * b[0][1] + a[0][1] * b[1][1]),
        (a[1][0] * b[0][0] + a[1][1] * b[1][0],
         a[1][0] * b[0][1] + a[1][1] * b[1][1]),
    )


def nested_model_kernel(x_ref, w1_ref, w2_ref, w3_ref, w4_ref, o_ref):
    # x_ref / o_ref are feature-major: (in_features=2, B) / (out_features=2, B)
    # with batch on the lane axis.  Weights live in SMEM as (2,2) scalars.
    #
    # Fold the whole linear chain in the prologue:
    #   y = x @ W1^T @ W2^T @ W3^T @ W4^T   (batch-major)
    #   => y_fm = M @ x_fm  with  M = W4 @ W3 @ W2 @ W1   (feature-major)
    w1 = _read2x2(w1_ref)
    w2 = _read2x2(w2_ref)
    w3 = _read2x2(w3_ref)
    w4 = _read2x2(w4_ref)
    m = _mat2(w4, _mat2(w3, _mat2(w2, w1)))

    x = x_ref[...].astype(jnp.float32)          # (2, B), f32 accumulation
    x0 = x[0:1, :]                              # static sublane selects only
    x1 = x[1:2, :]

    # Vector-scalar FMAs on the VPU (scalars come straight from SMEM/sregs).
    # Keep this form — MXU would be pure fill/drain at K=N=2.
    y0 = m[0][0] * x0 + m[0][1] * x1            # (1, B)
    y1 = m[1][0] * x0 + m[1][1] * x1            # (1, B)

    o_ref[...] = jnp.concatenate([y0, y1], axis=0).astype(o_ref.dtype)


def nested_model_forward(x, w1, w2, w3, w4):
    """x: (B, 2); w_i: (2, 2) torch-layout (out_features, in_features)."""
    batch, in_features = x.shape
    out_features = w4.shape[0]                  # derived, not assumed == in_features

    # Thin-wrapper layout plumbing: present x lane-dense (feature-major).
    x_fm = x.T                                  # (in_features, batch)

    y_fm = pl.pallas_call(
        nested_model_kernel,
        out_shape=jax.ShapeDtypeStruct((out_features, batch), x.dtype),
        # Whole problem is a single resident block; no grid at this size.
        in_specs=[
            pl.BlockSpec(memory_space=pltpu.MemorySpace.VMEM),   # x (feature-major)
            pl.BlockSpec(memory_space=pltpu.MemorySpace.SMEM),   # w1
            pl.BlockSpec(memory_space=pltpu.MemorySpace.SMEM),   # w2
            pl.BlockSpec(memory_space=pltpu.MemorySpace.SMEM),   # w3
            pl.BlockSpec(memory_space=pltpu.MemorySpace.SMEM),   # w4
        ],
        out_specs=pl.BlockSpec(memory_space=pltpu.MemorySpace.VMEM),
    )(x_fm, w1, w2, w3, w4)

    return y_fm.T                               # back to (batch, out_features)


def xavier_uniform(key, shape, gain=1.0):
    fan_out, fan_in = shape
    bound = gain * jnp.sqrt(6.0 / (fan_in + fan_out))
    return jax.random.uniform(
        key, shape, dtype=jnp.float32, minval=-bound, maxval=bound
    )


if __name__ == "__main__":
    # Deterministic params: in the torch module every layer re-seeds with 42,
    # so all four 2x2 weights are identical.
    w = xavier_uniform(jax.random.PRNGKey(42), (2, 2), gain=1.0)
    w1 = w2 = w3 = w4 = w

    # Small input consistent with Linear(2, 2): batch=8, features=2.
    x = jax.random.normal(jax.random.PRNGKey(0), (8, 2), dtype=jnp.float32)

    y = nested_model_forward(x, w1, w2, w3, w4)
    y = jax.block_until_ready(y)

    # Reference check in plain JAX (associativity differs slightly from the
    # sequential per-layer application; error ~1e-7, well within tolerance).
    ref = x @ w1.T @ w2.T @ w3.T @ w4.T
    assert y.shape == (8, 2), y.shape
    assert jnp.allclose(y, ref, atol=1e-5, rtol=1e-5)

    print("KERNEL_OK")
</pallas_src>

<mosaic_0001>
module attributes {stable_mosaic.version = 11 : i64} {
  func.func @nested_model_kernel(%arg0: memref<2x8xf32, #tpu.memory_space<vmem>>, %arg1: memref<2x2xf32, #tpu.memory_space<smem>>, %arg2: memref<2x2xf32, #tpu.memory_space<smem>>, %arg3: memref<2x2xf32, #tpu.memory_space<smem>>, %arg4: memref<2x2xf32, #tpu.memory_space<smem>>, %arg5: memref<2x8xf32, #tpu.memory_space<vmem>>) attributes {dimension_semantics = [], scalar_prefetch = 0 : i64, scratch_operands = 0 : i64, tpu.core_type = #tpu.core_type<tc>} {
    %c0 = arith.constant 0 : index
    %c0_0 = arith.constant 0 : index
    %0 = memref.load %arg1[%c0, %c0_0] : memref<2x2xf32, #tpu.memory_space<smem>>
    %c0_1 = arith.constant 0 : index
    %c1 = arith.constant 1 : index
    %1 = memref.load %arg1[%c0_1, %c1] : memref<2x2xf32, #tpu.memory_space<smem>>
    %c1_2 = arith.constant 1 : index
    %c0_3 = arith.constant 0 : index
    %2 = memref.load %arg1[%c1_2, %c0_3] : memref<2x2xf32, #tpu.memory_space<smem>>
    %c1_4 = arith.constant 1 : index
    %c1_5 = arith.constant 1 : index
    %3 = memref.load %arg1[%c1_4, %c1_5] : memref<2x2xf32, #tpu.memory_space<smem>>
    %c0_6 = arith.constant 0 : index
    %c0_7 = arith.constant 0 : index
    %4 = memref.load %arg2[%c0_6, %c0_7] : memref<2x2xf32, #tpu.memory_space<smem>>
    %c0_8 = arith.constant 0 : index
    %c1_9 = arith.constant 1 : index
    %5 = memref.load %arg2[%c0_8, %c1_9] : memref<2x2xf32, #tpu.memory_space<smem>>
    %c1_10 = arith.constant 1 : index
    %c0_11 = arith.constant 0 : index
    %6 = memref.load %arg2[%c1_10, %c0_11] : memref<2x2xf32, #tpu.memory_space<smem>>
    %c1_12 = arith.constant 1 : index
    %c1_13 = arith.constant 1 : index
    %7 = memref.load %arg2[%c1_12, %c1_13] : memref<2x2xf32, #tpu.memory_space<smem>>
    %c0_14 = arith.constant 0 : index
    %c0_15 = arith.constant 0 : index
    %8 = memref.load %arg3[%c0_14, %c0_15] : memref<2x2xf32, #tpu.memory_space<smem>>
    %c0_16 = arith.constant 0 : index
    %c1_17 = arith.constant 1 : index
    %9 = memref.load %arg3[%c0_16, %c1_17] : memref<2x2xf32, #tpu.memory_space<smem>>
    %c1_18 = arith.constant 1 : index
    %c0_19 = arith.constant 0 : index
    %10 = memref.load %arg3[%c1_18, %c0_19] : memref<2x2xf32, #tpu.memory_space<smem>>
    %c1_20 = arith.constant 1 : index
    %c1_21 = arith.constant 1 : index
    %11 = memref.load %arg3[%c1_20, %c1_21] : memref<2x2xf32, #tpu.memory_space<smem>>
    %c0_22 = arith.constant 0 : index
    %c0_23 = arith.constant 0 : index
    %12 = memref.load %arg4[%c0_22, %c0_23] : memref<2x2xf32, #tpu.memory_space<smem>>
    %c0_24 = arith.constant 0 : index
    %c1_25 = arith.constant 1 : index
    %13 = memref.load %arg4[%c0_24, %c1_25] : memref<2x2xf32, #tpu.memory_space<smem>>
    %c1_26 = arith.constant 1 : index
    %c0_27 = arith.constant 0 : index
    %14 = memref.load %arg4[%c1_26, %c0_27] : memref<2x2xf32, #tpu.memory_space<smem>>
    %c1_28 = arith.constant 1 : index
    %c1_29 = arith.constant 1 : index
    %15 = memref.load %arg4[%c1_28, %c1_29] : memref<2x2xf32, #tpu.memory_space<smem>>
    %16 = arith.mulf %4, %0 : f32
    %17 = arith.mulf %5, %2 : f32
    %18 = arith.addf %16, %17 : f32
    %19 = arith.mulf %4, %1 : f32
    %20 = arith.mulf %5, %3 : f32
    %21 = arith.addf %19, %20 : f32
    %22 = arith.mulf %6, %0 : f32
    %23 = arith.mulf %7, %2 : f32
    %24 = arith.addf %22, %23 : f32
    %25 = arith.mulf %6, %1 : f32
    %26 = arith.mulf %7, %3 : f32
    %27 = arith.addf %25, %26 : f32
    %28 = arith.mulf %8, %18 : f32
    %29 = arith.mulf %9, %24 : f32
    %30 = arith.addf %28, %29 : f32
    %31 = arith.mulf %8, %21 : f32
    %32 = arith.mulf %9, %27 : f32
    %33 = arith.addf %31, %32 : f32
    %34 = arith.mulf %10, %18 : f32
    %35 = arith.mulf %11, %24 : f32
    %36 = arith.addf %34, %35 : f32
    %37 = arith.mulf %10, %21 : f32
    %38 = arith.mulf %11, %27 : f32
    %39 = arith.addf %37, %38 : f32
    %40 = arith.mulf %12, %30 : f32
    %41 = arith.mulf %13, %36 : f32
    %42 = arith.addf %40, %41 : f32
    %43 = arith.mulf %12, %33 : f32
    %44 = arith.mulf %13, %39 : f32
    %45 = arith.addf %43, %44 : f32
    %46 = arith.mulf %14, %30 : f32
    %47 = arith.mulf %15, %36 : f32
    %48 = arith.addf %46, %47 : f32
    %49 = arith.mulf %14, %33 : f32
    %50 = arith.mulf %15, %39 : f32
    %51 = arith.addf %49, %50 : f32
    %c0_30 = arith.constant 0 : index
    %c0_31 = arith.constant 0 : index
    %52 = vector.load %arg0[%c0_30, %c0_31] : memref<2x8xf32, #tpu.memory_space<vmem>>, vector<2x8xf32>
    %53 = vector.extract_strided_slice %52 {offsets = [0, 0], sizes = [1, 8], strides = [1, 1]} : vector<2x8xf32> to vector<1x8xf32>
    %54 = vector.extract_strided_slice %52 {offsets = [1, 0], sizes = [1, 8], strides = [1, 1]} : vector<2x8xf32> to vector<1x8xf32>
    %55 = vector.broadcast %42 : f32 to vector<1x8xf32>
    %56 = arith.mulf %55, %53 : vector<1x8xf32>
    %57 = vector.broadcast %45 : f32 to vector<1x8xf32>
    %58 = arith.mulf %57, %54 : vector<1x8xf32>
    %59 = arith.addf %56, %58 : vector<1x8xf32>
    %60 = vector.broadcast %48 : f32 to vector<1x8xf32>
    %61 = arith.mulf %60, %53 : vector<1x8xf32>
    %62 = vector.broadcast %51 : f32 to vector<1x8xf32>
    %63 = arith.mulf %62, %54 : vector<1x8xf32>
    %64 = arith.addf %61, %63 : vector<1x8xf32>
    %65 = tpu.concatenate %59, %64 in 0 : vector<1x8xf32>, vector<1x8xf32> -> vector<2x8xf32>
    %c0_32 = arith.constant 0 : index
    %c0_33 = arith.constant 0 : index
    %66 = vector.load %arg5[%c0_32, %c0_33] : memref<2x8xf32, #tpu.memory_space<vmem>>, vector<2x8xf32>
    tpu.vector_store %arg5[%c0_32, %c0_33], %65 {strides = array<i32>} : memref<2x8xf32, #tpu.memory_space<vmem>>, vector<2x8xf32>,
    return
  }
}

</mosaic_0001>

<llo_original>
// kernel: tpu_custom_call.1
$region0: #{tpu_custom_call.1}
  #allocation0 [shape = 'u32[]', space=smem, size = 0x4, offset = 0x4, fixed_abs, tag = 'smem constant byte address 0x4 - core index']
  #allocation1 [shape = 'u32[72,128]{1,0:T(1,128)}', space=vmem, size = 0x9000, scoped, tag = 'internal scratch']
  %s0 = inlined_call_operand.hbm [shape: f32[2,8], index: 0, kind: input, shape index: {}]
  %s1 = inlined_call_operand.hbm [shape: f32[2,2], index: 1, kind: input, shape index: {}]
  %s2 = inlined_call_operand.hbm [shape: f32[2,2], index: 2, kind: input, shape index: {}]
  %s3 = inlined_call_operand.vmem [shape: f32[2,2], index: 3, kind: input, shape index: {}]
  %s4 = inlined_call_operand.hbm [shape: f32[2,2], index: 4, kind: input, shape index: {}]
  %s5 = inlined_call_operand.hbm [shape: f32[2,8], index: 5, kind: output, shape index: {}]
  %s6 = sld [smem:[#allocation0]]
  $region50: #{tpu_custom_call.1} parent=0
    _
  %s8 = ssub.s32 1, %s6
  %s9 = scalar_select 0, %s8, %s6
  $region1: #{tpu_custom_call.1} parent=0
    #allocation2 [shape = 'u8[1024]{0}', space=vmem, size = 0x400, scoped, tag = 'input window, operand 0, single buffered']
    #allocation3 [shape = 's32[1]{0}', space=sflag, size = 0x4, scoped, tag = 'scoped memory for tpu_custom_call.1']
    #allocation4 [shape = 's32[1]{0}', space=sflag, size = 0x4, scoped, tag = 'scoped memory for tpu_custom_call.1']
    #allocation5 [shape = 's32[1]{0}', space=sflag, size = 0x4, scoped, tag = 'scoped memory for tpu_custom_call.1']
    #allocation6 [shape = 's32[1]{0}', space=sflag, size = 0x4, scoped, tag = 'scoped memory for tpu_custom_call.1']
    #allocation7 [shape = 'u8[1024]{0}', space=smem, size = 0x400, scoped, tag = 'input window, operand 1, single buffered']
    #allocation8 [shape = 'u8[1024]{0}', space=smem, size = 0x400, scoped, tag = 'input window, operand 2, single buffered']
    #allocation9 [shape = 's32[1]{0}', space=sflag, size = 0x4, scoped, tag = 'scoped memory for tpu_custom_call.1']
    #allocation10 [shape = 'u8[1024]{0}', space=smem, size = 0x400, scoped, tag = 'input window, operand 3, single buffered']
    #allocation11 [shape = 'u8[1024]{0}', space=smem, size = 0x400, scoped, tag = 'input window, operand 4, single buffered']
    #allocation12 [shape = 'u8[1024]{0}', space=vmem, size = 0x400, scoped, tag = 'output window, operand 0, single buffered']
    %10 = vsyncpa [#allocation3], 0
    %11 = vsyncpa [#allocation5], 0
    %12 = vsyncpa [#allocation9], 0
    %13 = vsyncpa [#allocation6], 0
    %14 = vsyncpa [#allocation4], 0
    // Predicated region
    $region2: #{tpu_custom_call.1} parent=1 // pred_check
      _
    $region3: #{tpu_custom_call.1} parent=1 // pred_check_branch
      %16 = sbr.rel (0) target = $region5
    $region4: #{tpu_custom_call.1} parent=1 // pred_region
      %18 = vsyncadd [#allocation3], 0
      %s20 = sshll.u32 %s0, 4
      %s21 = int_to_ptr.hbm [resolvable:$true] %s20
      %s22 = sshll.u32 [#allocation2], 4
      %s23 = int_to_ptr.vmem [resolvable:$true] %s22
      %25 = dma.hbm_to_vmem [thread:$0]  %s21, 32, %s23, [#allocation3]
    $region5: #{tpu_custom_call.1} parent=1 // pred_fallthru
      _
    // Predicated region
    $region6: #{tpu_custom_call.1} parent=1 // pred_check
      _
    $region7: #{tpu_custom_call.1} parent=1 // pred_check_branch
      %27 = sbr.rel (0) target = $region9
    $region8: #{tpu_custom_call.1} parent=1 // pred_region
      %29 = vsyncadd [#allocation5], 0
      %s31 = sshll.u32 %s1, 4
      %s32 = int_to_ptr.hbm [resolvable:$true] %s31
      %34 = dma.hbm_to_smem %s32, 32, [#allocation7], [#allocation5]
    $region9: #{tpu_custom_call.1} parent=1 // pred_fallthru
      _
    // Predicated region
    $region10: #{tpu_custom_call.1} parent=1 // pred_check
      _
    $region11: #{tpu_custom_call.1} parent=1 // pred_check_branch
      %36 = sbr.rel (0) target = $region13
    $region12: #{tpu_custom_call.1} parent=1 // pred_region
      %38 = vsyncadd [#allocation9], 0
      %s40 = sshll.u32 %s2, 4
      %s41 = int_to_ptr.hbm [resolvable:$true] %s40
      %43 = dma.hbm_to_smem %s41, 32, [#allocation8], [#allocation9]
    $region13: #{tpu_custom_call.1} parent=1 // pred_fallthru
      _
    // Predicated region
    $region14: #{tpu_custom_call.1} parent=1 // pred_check
      _
    $region15: #{tpu_custom_call.1} parent=1 // pred_check_branch
      %45 = sbr.rel (0) target = $region17
    $region16: #{tpu_custom_call.1} parent=1 // pred_region
      %47 = vsyncadd [#allocation6], 0
      %s49 = sshll.u32 %s3, 4
      %s50 = int_to_ptr.vmem [resolvable:$true] %s49
      %52 = dma.vmem_to_smem %s50, 32, [#allocation10], [#allocation6]
    $region17: #{tpu_custom_call.1} parent=1 // pred_fallthru
      _
    // Predicated region
    $region18: #{tpu_custom_call.1} parent=1 // pred_check
      _
    $region19: #{tpu_custom_call.1} parent=1 // pred_check_branch
      %54 = sbr.rel (0) target = $region21
    $region20: #{tpu_custom_call.1} parent=1 // pred_region
      %56 = vsyncadd [#allocation9], 0
      %s58 = sshll.u32 %s4, 4
      %s59 = int_to_ptr.hbm [resolvable:$true] %s58
      %61 = dma.hbm_to_smem %s59, 32, [#allocation11], [#allocation9]
    $region21: #{tpu_custom_call.1} parent=1 // pred_fallthru
      _
    // Predicated region
    $region22: #{tpu_custom_call.1} parent=1 // pred_check
      _
    $region23: #{tpu_custom_call.1} parent=1 // pred_check_branch
      %63 = sbr.rel (0) target = $region25
    $region24: #{tpu_custom_call.1} parent=1 // pred_region
      %65 = dma.done [#allocation3], 32
    $region25: #{tpu_custom_call.1} parent=1 // pred_fallthru
      _
    // Predicated region
    $region26: #{tpu_custom_call.1} parent=1 // pred_check
      _
    $region27: #{tpu_custom_call.1} parent=1 // pred_check_branch
      %67 = sbr.rel (0) target = $region29
    $region28: #{tpu_custom_call.1} parent=1 // pred_region
      %69 = dma.done [#allocation5], 32
    $region29: #{tpu_custom_call.1} parent=1 // pred_fallthru
      _
    // Predicated region
    $region30: #{tpu_custom_call.1} parent=1 // pred_check
      _
    $region31: #{tpu_custom_call.1} parent=1 // pred_check_branch
      %71 = sbr.rel (0) target = $region33
    $region32: #{tpu_custom_call.1} parent=1 // pred_region
      %73 = dma.done [#allocation9], 32
    $region33: #{tpu_custom_call.1} parent=1 // pred_fallthru
      _
    // Predicated region
    $region34: #{tpu_custom_call.1} parent=1 // pred_check
      _
    $region35: #{tpu_custom_call.1} parent=1 // pred_check_branch
      %75 = sbr.rel (0) target = $region37
    $region36: #{tpu_custom_call.1} parent=1 // pred_region
      %77 = dma.done [#allocation6], 32
    $region37: #{tpu_custom_call.1} parent=1 // pred_fallthru
      _
    // Predicated region
    $region38: #{tpu_custom_call.1} parent=1 // pred_check
      _
    $region39: #{tpu_custom_call.1} parent=1 // pred_check_branch
      %79 = sbr.rel (0) target = $region41
    $region40: #{tpu_custom_call.1} parent=1 // pred_region
      %81 = dma.done [#allocation9], 32
    $region41: #{tpu_custom_call.1} parent=1 // pred_fallthru
      _
    %82 = sfence
    %s83 = sld [smem:[#allocation7]]
    %s84 = sld [smem:[#allocation7 + $0x1]]
    %s85 = sld [smem:[#allocation7 + $0x80]]
    %s86 = sld [smem:[#allocation7 + $0x81]]
    %s87 = sld [smem:[#allocation8]]
    %s88 = sld [smem:[#allocation8 + $0x1]]
    %s89 = sld [smem:[#allocation8 + $0x80]]
    %s90 = sld [smem:[#allocation8 + $0x81]]
    %s91 = sld [smem:[#allocation10]]
    %s92 = sld [smem:[#allocation10 + $0x1]]
    %s93 = sld [smem:[#allocation10 + $0x80]]
    %s94 = sld [smem:[#allocation10 + $0x81]]
    %s95 = sld [smem:[#allocation11]]
    %s96 = sld [smem:[#allocation11 + $0x1]]
    %s97 = sld [smem:[#allocation11 + $0x80]]
    %s98 = sld [smem:[#allocation11 + $0x81]]
    %s99 = smul.f32 %s87, %s83
    %s100 = smul.f32 %s88, %s85
    %s101 = sadd.f32 %s99, %s100
    %s102 = smul.f32 %s87, %s84
    %s103 = smul.f32 %s88, %s86
    %s104 = sadd.f32 %s102, %s103
    %s105 = smul.f32 %s89, %s83
    %s106 = smul.f32 %s90, %s85
    %s107 = sadd.f32 %s105, %s106
    %s108 = smul.f32 %s89, %s84
    %s109 = smul.f32 %s90, %s86
    %s110 = sadd.f32 %s108, %s109
    %s111 = smul.f32 %s91, %s101
    %s112 = smul.f32 %s92, %s107
    %s113 = sadd.f32 %s111, %s112
    %s114 = smul.f32 %s91, %s104
    %s115 = smul.f32 %s92, %s110
    %s116 = sadd.f32 %s114, %s115
    %s117 = smul.f32 %s93, %s101
    %s118 = smul.f32 %s94, %s107
    %s119 = sadd.f32 %s117, %s118
    %s120 = smul.f32 %s93, %s104
    %s121 = smul.f32 %s94, %s110
    %s122 = sadd.f32 %s120, %s121
    %s123 = smul.f32 %s95, %s113
    %s124 = smul.f32 %s96, %s119
    %s125 = sadd.f32 %s123, %s124
    %s126 = smul.f32 %s95, %s116
    %s127 = smul.f32 %s96, %s122
    %s128 = sadd.f32 %s126, %s127
    %s129 = smul.f32 %s97, %s113
    %s130 = smul.f32 %s98, %s119
    %s131 = sadd.f32 %s129, %s130
    %s132 = smul.f32 %s97, %s116
    %s133 = smul.f32 %s98, %s122
    %s134 = sadd.f32 %s132, %s133
    %v135 = vld [vmem:[#allocation2] sm:$0x3]
    %v136 = vstv %s125
    %v137 = vmul.f32 %v136, %v135
    %v138 = vstv %s128
    %v139 = vmul.f32 %v138, %v135
    %v141 = vrot.slane %v139, 1
    %v143 = vadd.f32 %v137, %v141
    %v144 = vstv %s131
    %v145 = vmul.f32 %v144, %v135
    %v146 = vstv %s134
    %v147 = vmul.f32 %v146, %v135
    %v149 = vrot.slane %v147, 1
    %v151 = vadd.f32 %v145, %v149
    %v153 = vrot.slane %v151, 7
    %vm155 = vcmask 1040384
    %v156 = vsel %vm155, %v143, %v153
    %vm157 = vcmask 58368
    %158 = vst.msk [vmem:[#allocation12] sm:$0x3] %vm157, %v156
    // Predicated region
    $region42: #{tpu_custom_call.1} parent=1 // pred_check
      _
    $region43: #{tpu_custom_call.1} parent=1 // pred_check_branch
      %160 = sbr.rel (0) target = $region45
    $region44: #{tpu_custom_call.1} parent=1 // pred_region
      %162 = vsyncadd [#allocation4], 0
      %s164 = sshll.u32 [#allocation12], 4
      %s165 = int_to_ptr.vmem [resolvable:$true] %s164
      %s166 = sshll.u32 %s5, 4
      %s167 = int_to_ptr.hbm [resolvable:$true] %s166
      %169 = dma.vmem_to_hbm [thread:$0]  %s165, 32, %s167, [#allocation4]
    $region45: #{tpu_custom_call.1} parent=1 // pred_fallthru
      _
    // Predicated region
    $region46: #{tpu_custom_call.1} parent=1 // pred_check
      _
    $region47: #{tpu_custom_call.1} parent=1 // pred_check_branch
      %171 = sbr.rel (0) target = $region49
    $region48: #{tpu_custom_call.1} parent=1 // pred_region
      %173 = dma.done [#allocation4], 32
    $region49: #{tpu_custom_call.1} parent=1 // pred_fallthru
      _
    %174 = vsyncpa [#allocation3], 1
    %175 = vsyncpa [#allocation4], 1
    %176 = vsyncpa [#allocation5], 1
    %177 = vsyncpa [#allocation9], 1
    %178 = vsyncpa [#allocation6], 1

</llo_original>
